<compile_context>
chip_gen: v7x
topology: tpu7x:2x2x1
jax: 0.10.0
libtpu: 0.0.40
codegen_flags: <defaults>
</compile_context>

<pallas_src>
import functools

import jax
import jax.numpy as jnp
from jax.experimental import pallas as pl
from jax.experimental.pallas import tpu as pltpu


# ----------------------------- kernel ---------------------------------------


def mlp_kernel(x_ref, w1_ref, b1_ref, w2_ref, b2_ref, o_ref):
    # linear1: (TB, D_in) @ (D_in, Hp) with f32 accumulation on the MXU.
    h = jnp.dot(x_ref[...], w1_ref[...], preferred_element_type=jnp.float32)
    # bias add + ReLU on the VALU (biases stay f32; padded H columns are exactly 0).
    h = jnp.maximum(h + b1_ref[...], 0.0)
    # linear2: (TB, Hp) @ (Hp, Op); cast h back to the weight dtype (bf16) for the MXU.
    y = jnp.dot(h.astype(w2_ref.dtype), w2_ref[...],
                preferred_element_type=jnp.float32)
    y = y + b2_ref[...]
    # Exact sigmoid with a single EUP op: sigmoid(y) = 0.5 * tanh(0.5 * y) + 0.5.
    o_ref[...] = (0.5 * jnp.tanh(0.5 * y) + 0.5).astype(o_ref.dtype)


# ----------------------------- helpers ---------------------------------------


def _cdiv(a, b):
    return -(-a // b)


def _round_up(n, m):
    return _cdiv(n, m) * m


def _pad_to(a, shape):
    pads = [(0, t - s) for s, t in zip(a.shape, shape)]
    if any(hi for _, hi in pads):
        return jnp.pad(a, pads)
    return a


def _physical_vmem_bytes():
    # Trace-time hardware query; conservative 64 MiB (v7x per-TC) fallback works on
    # every generation.
    try:
        return int(pltpu.get_tpu_info().vmem_capacity_bytes)
    except Exception:
        return 64 << 20


def _vmem_estimate(TB, D_in, Hp, Op, in_bytes, out_bytes):
    # Resident weights are double-buffered by the default pipeline mode; x/out tiles
    # are double-buffered; h/y intermediates are f32 in-register/VMEM.
    weights = 2 * (D_in * Hp + Hp * Op) * in_bytes
    biases = 2 * (Hp + Op) * 4
    x_tiles = 2 * TB * D_in * in_bytes
    o_tiles = 2 * TB * Op * out_bytes
    interm = TB * Hp * 4 + 2 * TB * Op * 4
    return weights + biases + x_tiles + o_tiles + interm


# ----------------------------- host-side API ---------------------------------


def prepare_params(w1, b1, w2, b2, use_bf16=True):
    """One-time weight preparation (hoisted out of the per-call path).

    Pads H and D_out to multiples of 128 (lane-dense intermediates and output) and
    casts the weight matrices to bf16 for the MXU. D_in is deliberately left unpadded
    so x never has to be lane-padded. Zero padding is exact: padded h columns are
    relu(0 + 0) = 0 and padded output columns are sliced off by the caller.
    """
    D_in, H = w1.shape
    D_out = w2.shape[1]
    Hp = _round_up(H, 128)
    Op = _round_up(D_out, 128)
    wdt = jnp.bfloat16 if use_bf16 else jnp.float32
    w1p = _pad_to(w1, (D_in, Hp)).astype(wdt)
    w2p = _pad_to(w2, (Hp, Op)).astype(wdt)
    b1p = _pad_to(b1, (1, Hp)).astype(jnp.float32)   # biases stay f32 (tiny, exact)
    b2p = _pad_to(b2, (1, Op)).astype(jnp.float32)
    return w1p, b1p, w2p, b2p


@functools.partial(jax.jit, static_argnames=("out_dim",))
def mlp_forward(x, w1p, b1p, w2p, b2p, *, out_dim):
    """x: (B, D_in) float32; params from prepare_params; returns (B, out_dim) in x.dtype."""
    B, D_in = x.shape
    Hp = w1p.shape[1]
    Op = w2p.shape[1]
    in_dtype = w1p.dtype
    in_bytes = in_dtype.itemsize
    out_dtype = x.dtype
    out_bytes = out_dtype.itemsize

    vmem_cap = int(0.85 * _physical_vmem_bytes())

    # Balanced batch tiles: split B into cdiv(B, 512) near-equal tiles (amortizes the
    # ~0.35us per-step cost) instead of padding up to a multiple of 512; keep sublane
    # alignment (16 rows for bf16 packing, 8 for f32). Halve TB until the VMEM budget
    # fits the current generation (re-budgets automatically for v7x's 64 MiB).
    sub = 16 if in_bytes == 2 else 8
    TB = _round_up(_cdiv(B, _cdiv(B, 512)), sub)
    while TB > sub and _vmem_estimate(TB, D_in, Hp, Op, in_bytes, out_bytes) > vmem_cap:
        TB = _round_up(max(TB // 2, sub), sub)
    Bp = _round_up(B, TB)
    # TODO(synk): for D_in/H >= ~4k the resident-weight single-K layout no longer fits
    # VMEM; add a K-reduction grid axis ("arbitrary", last) with an f32 VMEM accumulator.

    est = _vmem_estimate(TB, D_in, Hp, Op, in_bytes, out_bytes)
    vmem_limit = int(min(vmem_cap, max(est * 3 // 2 + (8 << 20), 32 << 20)))

    # Only the batch dim of x is (possibly) padded; D_in stays unpadded so x DMA bytes
    # are not inflated for narrow inputs.
    xp = _pad_to(x, (Bp, D_in)).astype(in_dtype)

    out = pl.pallas_call(
        mlp_kernel,
        out_shape=jax.ShapeDtypeStruct((Bp, Op), out_dtype),
        grid_spec=pltpu.PrefetchScalarGridSpec(
            num_scalar_prefetch=0,
            grid=(Bp // TB,),
            in_specs=[
                pl.BlockSpec((TB, D_in), lambda i: (i, 0)),   # x: tiled over batch
                pl.BlockSpec((D_in, Hp), lambda i: (0, 0)),   # W1: VMEM-resident
                pl.BlockSpec((1, Hp), lambda i: (0, 0)),      # b1: VMEM-resident
                pl.BlockSpec((Hp, Op), lambda i: (0, 0)),     # W2: VMEM-resident
                pl.BlockSpec((1, Op), lambda i: (0, 0)),      # b2: VMEM-resident
            ],
            out_specs=pl.BlockSpec((TB, Op), lambda i: (i, 0)),
        ),
        compiler_params=pltpu.CompilerParams(
            # Batch rows are independent: shard the grid across v7x's 2 TensorCores
            # (no-op on v5e/v6e).
            dimension_semantics=("parallel",),
            vmem_limit_bytes=vmem_limit,
        ),
    )(xp, w1p, b1p, w2p, b2p)

    return out[:B, :out_dim]


def init_params(key, input_dim, hidden_dim, output_dim):
    """Deterministic init mimicking nn.Linear's uniform(-1/sqrt(fan_in), 1/sqrt(fan_in))."""
    k1, k2, k3, k4 = jax.random.split(key, 4)
    bound1 = 1.0 / jnp.sqrt(input_dim)
    bound2 = 1.0 / jnp.sqrt(hidden_dim)
    w1 = jax.random.uniform(k1, (input_dim, hidden_dim), jnp.float32, -bound1, bound1)
    b1 = jax.random.uniform(k2, (1, hidden_dim), jnp.float32, -bound1, bound1)
    w2 = jax.random.uniform(k3, (hidden_dim, output_dim), jnp.float32, -bound2, bound2)
    b2 = jax.random.uniform(k4, (1, output_dim), jnp.float32, -bound2, bound2)
    return w1, b1, w2, b2


if __name__ == "__main__":
    batch, input_dim, hidden_dim, output_dim = 8, 16, 32, 4

    key = jax.random.PRNGKey(0)
    kx, kp = jax.random.split(key)
    x = jax.random.normal(kx, (batch, input_dim), jnp.float32)
    w1, b1, w2, b2 = init_params(kp, input_dim, hidden_dim, output_dim)

    # One-time weight prep (padding + bf16 cast), reused across forward calls.
    params = prepare_params(w1, b1, w2, b2, use_bf16=True)

    out = mlp_forward(x, *params, out_dim=output_dim)
    out = jax.block_until_ready(out)

    # Pure-JAX f32 reference of the same forward semantics.
    ref = jax.nn.sigmoid(jnp.maximum(x @ w1 + b1, 0.0) @ w2 + b2)
    assert out.shape == (batch, output_dim)
    # Tolerance accounts for bf16 inputs/weights on the MXU (f32 accumulation kept).
    assert jnp.allclose(out, ref, atol=1e-2, rtol=1e-2), float(jnp.max(jnp.abs(out - ref)))

    print("KERNEL_OK")
</pallas_src>

<mosaic_0001>
module attributes {stable_mosaic.version = 11 : i64} {
  func.func @mlp_kernel(%arg0: i32, %arg1: memref<16x16xbf16, #tpu.memory_space<vmem>>, %arg2: memref<16x128xbf16, #tpu.memory_space<vmem>>, %arg3: memref<1x128xf32, #tpu.memory_space<vmem>>, %arg4: memref<128x128xbf16, #tpu.memory_space<vmem>>, %arg5: memref<1x128xf32, #tpu.memory_space<vmem>>, %arg6: memref<16x128xf32, #tpu.memory_space<vmem>>) attributes {dimension_semantics = [#tpu.dimension_semantics<parallel>], iteration_bounds = array<i64: 1>, scalar_prefetch = 0 : i64, scratch_operands = 0 : i64, tpu.core_type = #tpu.core_type<tc>, window_params = [{transform_indices = @transform_0, window_bounds = array<i64: 16, 16>}, {pipeline_mode = #tpu.pipeline_mode<synchronous>, transform_indices = @transform_1, window_bounds = array<i64: 16, 128>}, {pipeline_mode = #tpu.pipeline_mode<synchronous>, transform_indices = @transform_2, window_bounds = array<i64: 1, 128>}, {pipeline_mode = #tpu.pipeline_mode<synchronous>, transform_indices = @transform_3, window_bounds = array<i64: 128, 128>}, {pipeline_mode = #tpu.pipeline_mode<synchronous>, transform_indices = @transform_4, window_bounds = array<i64: 1, 128>}, {transform_indices = @transform_5, window_bounds = array<i64: 16, 128>}]} {
    %c0 = arith.constant 0 : index
    %c0_0 = arith.constant 0 : index
    %0 = vector.load %arg1[%c0, %c0_0] : memref<16x16xbf16, #tpu.memory_space<vmem>>, vector<16x16xbf16>
    %c0_1 = arith.constant 0 : index
    %c0_2 = arith.constant 0 : index
    %1 = vector.load %arg2[%c0_1, %c0_2] : memref<16x128xbf16, #tpu.memory_space<vmem>>, vector<16x128xbf16>
    %cst = arith.constant dense<0.000000e+00> : vector<16x128xf32>
    %2 = tpu.matmul %0, %1, %cst {dimension_numbers = #tpu.dot_dimension_numbers<[1], [0], [0], [1], [0, 0, 1, 1], [], []>} : vector<16x16xbf16>, vector<16x128xbf16>, vector<16x128xf32> -> vector<16x128xf32>
    %c0_3 = arith.constant 0 : index
    %c0_4 = arith.constant 0 : index
    %3 = vector.load %arg3[%c0_3, %c0_4] : memref<1x128xf32, #tpu.memory_space<vmem>>, vector<1x128xf32>
    %4 = vector.broadcast %3 : vector<1x128xf32> to vector<16x128xf32>
    %5 = arith.addf %2, %4 : vector<16x128xf32>
    %cst_5 = arith.constant 0.000000e+00 : f32
    %6 = vector.broadcast %cst_5 : f32 to vector<16x128xf32>
    %7 = arith.maximumf %5, %6 : vector<16x128xf32>
    %8 = arith.truncf %7 : vector<16x128xf32> to vector<16x128xbf16>
    %c0_6 = arith.constant 0 : index
    %c0_7 = arith.constant 0 : index
    %9 = vector.load %arg4[%c0_6, %c0_7] : memref<128x128xbf16, #tpu.memory_space<vmem>>, vector<128x128xbf16>
    %cst_8 = arith.constant dense<0.000000e+00> : vector<16x128xf32>
    %10 = tpu.matmul %8, %9, %cst_8 {dimension_numbers = #tpu.dot_dimension_numbers<[1], [0], [0], [1], [0, 0, 1, 1], [], []>} : vector<16x128xbf16>, vector<128x128xbf16>, vector<16x128xf32> -> vector<16x128xf32>
    %c0_9 = arith.constant 0 : index
    %c0_10 = arith.constant 0 : index
    %11 = vector.load %arg5[%c0_9, %c0_10] : memref<1x128xf32, #tpu.memory_space<vmem>>, vector<1x128xf32>
    %12 = vector.broadcast %11 : vector<1x128xf32> to vector<16x128xf32>
    %13 = arith.addf %10, %12 : vector<16x128xf32>
    %cst_11 = arith.constant 5.000000e-01 : f32
    %14 = vector.broadcast %cst_11 : f32 to vector<16x128xf32>
    %15 = arith.mulf %14, %13 : vector<16x128xf32>
    %16 = math.tanh %15 : vector<16x128xf32>
    %cst_12 = arith.constant 5.000000e-01 : f32
    %17 = vector.broadcast %cst_12 : f32 to vector<16x128xf32>
    %18 = arith.mulf %17, %16 : vector<16x128xf32>
    %cst_13 = arith.constant 5.000000e-01 : f32
    %19 = vector.broadcast %cst_13 : f32 to vector<16x128xf32>
    %20 = arith.addf %18, %19 : vector<16x128xf32>
    %c0_14 = arith.constant 0 : index
    %c0_15 = arith.constant 0 : index
    %21 = vector.load %arg6[%c0_14, %c0_15] : memref<16x128xf32, #tpu.memory_space<vmem>>, vector<16x128xf32>
    tpu.vector_store %arg6[%c0_14, %c0_15], %20 {strides = array<i32>} : memref<16x128xf32, #tpu.memory_space<vmem>>, vector<16x128xf32>,
    return
  }
  func.func @transform_0(%arg0: i32) -> (i32, i32) {
    %c0_i32 = arith.constant 0 : i32
    %c0_i32_0 = arith.constant 0 : i32
    return %arg0, %c0_i32 : i32, i32
  }
  func.func @transform_1(%arg0: i32) -> (i32, i32) {
    %c0_i32 = arith.constant 0 : i32
    %c0_i32_0 = arith.constant 0 : i32
    %c0_i32_1 = arith.constant 0 : i32
    return %c0_i32, %c0_i32_0 : i32, i32
  }
  func.func @transform_2(%arg0: i32) -> (i32, i32) {
    %c0_i32 = arith.constant 0 : i32
    %c0_i32_0 = arith.constant 0 : i32
    %c0_i32_1 = arith.constant 0 : i32
    return %c0_i32, %c0_i32_0 : i32, i32
  }
  func.func @transform_3(%arg0: i32) -> (i32, i32) {
    %c0_i32 = arith.constant 0 : i32
    %c0_i32_0 = arith.constant 0 : i32
    %c0_i32_1 = arith.constant 0 : i32
    return %c0_i32, %c0_i32_0 : i32, i32
  }
  func.func @transform_4(%arg0: i32) -> (i32, i32) {
    %c0_i32 = arith.constant 0 : i32
    %c0_i32_0 = arith.constant 0 : i32
    %c0_i32_1 = arith.constant 0 : i32
    return %c0_i32, %c0_i32_0 : i32, i32
  }
  func.func @transform_5(%arg0: i32) -> (i32, i32) {
    %c0_i32 = arith.constant 0 : i32
    %c0_i32_0 = arith.constant 0 : i32
    return %arg0, %c0_i32 : i32, i32
  }
}

</mosaic_0001>

<llo_original>
// kernel: mlp_forward.1
$region0: #{mlp_forward.1}
  #allocation0 [shape = 'u32[]', space=smem, size = 0x4, offset = 0x4, fixed_abs, tag = 'smem constant byte address 0x4 - core index']
  #allocation1 [shape = 'u32[144,128]{1,0:T(1,128)}', space=vmem, size = 0x12000, scoped, tag = 'internal scratch']
  %s0 = inlined_call_operand.vmem [shape: bf16[16,16], index: 0, kind: input, shape index: {}]
  %s1 = inlined_call_operand.vmem [shape: bf16[16,128], index: 1, kind: input, shape index: {}]
  %s2 = inlined_call_operand.vmem [shape: f32[1,128], index: 2, kind: input, shape index: {}]
  %s3 = inlined_call_operand.hbm [shape: bf16[128,128], index: 3, kind: input, shape index: {}]
  %s4 = inlined_call_operand.vmem [shape: f32[1,128], index: 4, kind: input, shape index: {}]
  %s5 = inlined_call_operand.vmem [shape: f32[16,128], index: 5, kind: output, shape index: {}]
  %s6 = sld [smem:[#allocation0]]
  $region34: #{mlp_forward.1} parent=0
    _
  %s8 = ssub.s32 1, %s6
  %s9 = scalar_select 0, %s8, %s6
  $region1: #{mlp_forward.1} parent=0
    #allocation2 [shape = 'u8[32768]{0}', space=vmem, size = 0x8000, scoped, tag = 'input window, operand 3, single buffered']
    #allocation3 [shape = 's32[1]{0}', space=sflag, size = 0x4, scoped, tag = 'scoped memory for mlp_forward.1']
    %10 = vsyncpa [#allocation3], 0
    // Predicated region
    $region2: #{mlp_forward.1} parent=1 // pred_check
      _
    $region3: #{mlp_forward.1} parent=1 // pred_check_branch
      %12 = sbr.rel (0) target = $region5
    $region4: #{mlp_forward.1} parent=1 // pred_region
      _
    $region5: #{mlp_forward.1} parent=1 // pred_fallthru
      _
    // Predicated region
    $region6: #{mlp_forward.1} parent=1 // pred_check
      _
    $region7: #{mlp_forward.1} parent=1 // pred_check_branch
      %14 = sbr.rel (0) target = $region9
    $region8: #{mlp_forward.1} parent=1 // pred_region
      _
    $region9: #{mlp_forward.1} parent=1 // pred_fallthru
      _
    // Predicated region
    $region10: #{mlp_forward.1} parent=1 // pred_check
      _
    $region11: #{mlp_forward.1} parent=1 // pred_check_branch
      %16 = sbr.rel (0) target = $region13
    $region12: #{mlp_forward.1} parent=1 // pred_region
      _
    $region13: #{mlp_forward.1} parent=1 // pred_fallthru
      _
    // Predicated region
    $region14: #{mlp_forward.1} parent=1 // pred_check
      _
    $region15: #{mlp_forward.1} parent=1 // pred_check_branch
      %18 = sbr.rel (0) target = $region17
    $region16: #{mlp_forward.1} parent=1 // pred_region
      %s20 = ssub.s32 1024, 1024
      %21 = vsyncadd [#allocation3], %s20
      %s22 = sshll.u32 [#allocation2], 4
      %s23 = int_to_ptr.vmem [resolvable:$true] %s22
      %28 = dma.hbm_to_vmem [thread:$0]  %s3, 1024, %s23, [#allocation3], 64, 64, 4
    $region17: #{mlp_forward.1} parent=1 // pred_fallthru
      _
    // Predicated region
    $region18: #{mlp_forward.1} parent=1 // pred_check
      _
    $region19: #{mlp_forward.1} parent=1 // pred_check_branch
      %30 = sbr.rel (0) target = $region21
    $region20: #{mlp_forward.1} parent=1 // pred_region
      _
    $region21: #{mlp_forward.1} parent=1 // pred_fallthru
      _
    // Predicated region
    $region22: #{mlp_forward.1} parent=1 // pred_check
      _
    $region23: #{mlp_forward.1} parent=1 // pred_check_branch
      %32 = sbr.rel (0) target = $region25
    $region24: #{mlp_forward.1} parent=1 // pred_region
      %33 = dma.done [#allocation3], 1024
    $region25: #{mlp_forward.1} parent=1 // pred_fallthru
      _
    %v35 = vld [vmem:[%s0] sm:$0xf]
    %v36 = vld [vmem:[%s0 + $0x4] sm:$0xf]
    %v37 = vld [vmem:[%s1] sm:$0xf]
    %v38 = vld [vmem:[%s1 + $0x4] sm:$0xf]
    %v39 = vld [vmem:[%s2] sm:$0x1]
    %v41 = vlaneseq
    %v42 = vshrl.u32 %v41, 7
    %v43 = vsub.s32 0, %v42
    %v44 = vrot.slane %v39, %v43
    %v48 = vunpack.c.l.b16 %v35
    %v49 = vunpack.c.l.b16 %v36
    %v50 = vpack.c.b16 %v49, %v48
    %v53 = vunpack.c.l.b16 %v37
    %v54 = vunpack.c.l.b16 %v38
    %v55 = vpack.c.b16 %v54, %v53
    %vm57 = vcmask 130048
    %v59 = vsel %vm57, %v50, 0
    %61 = vmatprep.subr.bf16.mxu0 0
    %62 = vmatpush1.bf16.msra.mxu0 %v55
    %63 = vmatprep.subr.bf16.mxu0 0
    %64 = vmatpush1.bf16.msra.mxu0 0
    %65 = vmatprep.subr.bf16.mxu0 0
    %66 = vmatpush1.bf16.msra.mxu0 0
    %67 = vmatprep.subr.bf16.mxu0 0
    %68 = vmatpush1.bf16.msra.mxu0 0
    %69 = vmatprep.subr.bf16.mxu0 0
    %70 = vmatpush1.bf16.msra.mxu0 0
    %71 = vmatprep.subr.bf16.mxu0 0
    %72 = vmatpush1.bf16.msra.mxu0 0
    %73 = vmatprep.subr.bf16.mxu0 0
    %74 = vmatpush1.bf16.msra.mxu0 0
    %75 = vmatprep.subr.bf16.mxu0 0
    %76 = vmatpush1.bf16.msra.mxu0 0
    %77 = vmatprep.subr.bf16.mxu0 0
    %78 = vmatpush1.bf16.msra.mxu0 0
    %79 = vmatprep.subr.bf16.mxu0 0
    %80 = vmatpush1.bf16.msra.mxu0 0
    %81 = vmatprep.subr.bf16.mxu0 0
    %82 = vmatpush1.bf16.msra.mxu0 0
    %83 = vmatprep.subr.bf16.mxu0 0
    %84 = vmatpush1.bf16.msra.mxu0 0
    %85 = vmatprep.subr.bf16.mxu0 0
    %86 = vmatpush1.bf16.msra.mxu0 0
    %87 = vmatprep.subr.bf16.mxu0 0
    %88 = vmatpush1.bf16.msra.mxu0 0
    %89 = vmatprep.subr.bf16.mxu0 0
    %90 = vmatpush1.bf16.msra.mxu0 0
    %91 = vmatprep.subr.bf16.mxu0 0
    %92 = vmatpush1.bf16.msra.mxu0 0
    %93 = vmatprep.mubr.bf16.mxu0 0
    %94 = vmatmul.mubr.bf16.gmra.mrb[0].mxu0 %v59
    %v95 = vpop.f32.mrb[0].mxu0
    %v96 = vadd.f32 %v44, %v95
    %v97 = vpop.f32.mrb[0].mxu0
    %v98 = vpop.f32.mrb[0].mxu0
    %v99 = vadd.f32 %v44, %v98
    %v100 = vpop.f32.mrb[0].mxu0
    %101 = vdwg.mxu0
    %v102 = vmax.f32 %v96, 0.0
    %v103 = vmax.f32 %v99, 0.0
    %v104 = vpack.c.bf16 %v103, %v102
    %v105 = vld [vmem:[#allocation2] sm:$0xf]
    %v106 = vld [vmem:[#allocation2 + $0x4] sm:$0xf]
    %v107 = vld [vmem:[#allocation2 + $0x8] sm:$0xf]
    %v108 = vld [vmem:[#allocation2 + $0xc] sm:$0xf]
    %v109 = vld [vmem:[#allocation2 + $0x10] sm:$0xf]
    %v110 = vld [vmem:[#allocation2 + $0x14] sm:$0xf]
    %v111 = vld [vmem:[#allocation2 + $0x18] sm:$0xf]
    %v112 = vld [vmem:[#allocation2 + $0x1c] sm:$0xf]
    %v113 = vld [vmem:[#allocation2 + $0x20] sm:$0xf]
    %v114 = vld [vmem:[#allocation2 + $0x24] sm:$0xf]
    %v115 = vld [vmem:[#allocation2 + $0x28] sm:$0xf]
    %v116 = vld [vmem:[#allocation2 + $0x2c] sm:$0xf]
    %v117 = vld [vmem:[#allocation2 + $0x30] sm:$0xf]
    %v118 = vld [vmem:[#allocation2 + $0x34] sm:$0xf]
    %v119 = vld [vmem:[#allocation2 + $0x38] sm:$0xf]
    %v120 = vld [vmem:[#allocation2 + $0x3c] sm:$0xf]
    %v121 = vld [vmem:[%s4] sm:$0x1]
    %v123 = vlaneseq
    %v124 = vshrl.u32 %v123, 7
    %v125 = vsub.s32 0, %v124
    %v126 = vrot.slane %v121, %v125
    %v144 = vunpack.c.l.b16 %v105
    %v145 = vunpack.c.l.b16 %v106
    %v146 = vunpack.c.l.b16 %v107
    %v147 = vunpack.c.l.b16 %v108
    %v148 = vunpack.c.l.b16 %v109
    %v149 = vunpack.c.l.b16 %v110
    %v150 = vunpack.c.l.b16 %v111
    %v151 = vunpack.c.l.b16 %v112
    %v152 = vunpack.c.l.b16 %v113
    %v153 = vunpack.c.l.b16 %v114
    %v154 = vunpack.c.l.b16 %v115
    %v155 = vunpack.c.l.b16 %v116
    %v156 = vunpack.c.l.b16 %v117
    %v157 = vunpack.c.l.b16 %v118
    %v158 = vunpack.c.l.b16 %v119
    %v159 = vunpack.c.l.b16 %v120
    %v160 = vpack.c.b16 %v145, %v144
    %v161 = vpack.c.b16 %v147, %v146
    %v162 = vpack.c.b16 %v149, %v148
    %v163 = vpack.c.b16 %v151, %v150
    %v164 = vpack.c.b16 %v153, %v152
    %v165 = vpack.c.b16 %v155, %v154
    %v166 = vpack.c.b16 %v157, %v156
    %v167 = vpack.c.b16 %v159, %v158
    %176 = vmatprep.subr.bf16.mxu0 0
    %177 = vmatpush1.bf16.msra.mxu0 %v160
    %178 = vmatprep.subr.bf16.mxu0 0
    %179 = vmatpush1.bf16.msra.mxu0 %v161
    %180 = vmatprep.subr.bf16.mxu0 0
    %181 = vmatpush1.bf16.msra.mxu0 %v162
    %182 = vmatprep.subr.bf16.mxu0 0
    %183 = vmatpush1.bf16.msra.mxu0 %v163
    %184 = vmatprep.subr.bf16.mxu0 0
    %185 = vmatpush1.bf16.msra.mxu0 %v164
    %186 = vmatprep.subr.bf16.mxu0 0
    %187 = vmatpush1.bf16.msra.mxu0 %v165
    %188 = vmatprep.subr.bf16.mxu0 0
    %189 = vmatpush1.bf16.msra.mxu0 %v166
    %190 = vmatprep.subr.bf16.mxu0 0
    %191 = vmatpush1.bf16.msra.mxu0 %v167
    %192 = vmatprep.subr.bf16.mxu0 0
    %193 = vmatpush1.bf16.msra.mxu0 0
    %194 = vmatprep.subr.bf16.mxu0 0
    %195 = vmatpush1.bf16.msra.mxu0 0
    %196 = vmatprep.subr.bf16.mxu0 0
    %197 = vmatpush1.bf16.msra.mxu0 0
    %198 = vmatprep.subr.bf16.mxu0 0
    %199 = vmatpush1.bf16.msra.mxu0 0
    %200 = vmatprep.subr.bf16.mxu0 0
    %201 = vmatpush1.bf16.msra.mxu0 0
    %202 = vmatprep.subr.bf16.mxu0 0
    %203 = vmatpush1.bf16.msra.mxu0 0
    %204 = vmatprep.subr.bf16.mxu0 0
    %205 = vmatpush1.bf16.msra.mxu0 0
    %206 = vmatprep.subr.bf16.mxu0 0
    %207 = vmatpush1.bf16.msra.mxu0 0
    %208 = vmatprep.mubr.bf16.mxu0 0
    %209 = vmatmul.mubr.bf16.gmra.mrb[0].mxu0 %v104
    %v210 = vpop.f32.mrb[0].mxu0
    %v211 = vadd.f32 %v126, %v210
    %v212 = vpop.f32.mrb[0].mxu0
    %v213 = vpop.f32.mrb[0].mxu0
    %v214 = vadd.f32 %v126, %v213
    %v215 = vpop.f32.mrb[0].mxu0
    %216 = vdwg.mxu0
    %v217 = vmul.f32 %v211, 0.5
    %v218 = vmul.f32 %v214, 0.5
    %v219 = vtanh.pop %v217
    %v220 = vtanh.pop %v218
    %v221 = vmul.f32 %v219, 0.5
    %v222 = vmul.f32 %v220, 0.5
    %v223 = vadd.f32 %v221, 0.5
    %v224 = vadd.f32 %v222, 0.5
    %225 = vst [vmem:[%s5] sm:$0xff] %v223
    %226 = vst [vmem:[%s5 + $0x8] sm:$0xff] %v224
    // Predicated region
    $region26: #{mlp_forward.1} parent=1 // pred_check
      _
    $region27: #{mlp_forward.1} parent=1 // pred_check_branch
      %228 = sbr.rel (0) target = $region29
    $region28: #{mlp_forward.1} parent=1 // pred_region
      _
    $region29: #{mlp_forward.1} parent=1 // pred_fallthru
      _
    // Predicated region
    $region30: #{mlp_forward.1} parent=1 // pred_check
      _
    $region31: #{mlp_forward.1} parent=1 // pred_check_branch
      %230 = sbr.rel (0) target = $region33
    $region32: #{mlp_forward.1} parent=1 // pred_region
      _
    $region33: #{mlp_forward.1} parent=1 // pred_fallthru
      _
    %231 = vsyncpa [#allocation3], 1

</llo_original>
